<compile_context>
chip_gen: v6e
topology: v6e:2x2x1
jax: 0.10.0
libtpu: 0.0.40
codegen_flags: <defaults>
</compile_context>

<pallas_src>
import functools

import jax
import jax.numpy as jnp
import numpy as np
from jax.experimental import pallas as pl
from jax.experimental.pallas import tpu as pltpu

PAD = 4           # pad_size from __init__
CLIP = 0.2        # brightness_clip from __init__


def _augment_kernel(bright_ref, x_ref, src_ref, o_ref, *, HW):
    """bright_ref: (1,) f32 in SMEM.
    x_ref:   (1, C, HW) f32  -- one sample, channels on sublanes, H*W on lanes.
    src_ref: (1, 1, HW) i32  -- flattened source pixel index per output pixel
                                (crop offsets + replication clamp baked in).
    o_ref:   (1, C, HW) f32."""
    bright = bright_ref[0]

    # One-hot gather matrix: sel[p, q] = (p == src[q]).
    # y[c, q] = sum_p x[c, p] * sel[p, q] = x[c, src[q]]  -> crop + replication pad.
    p = jax.lax.broadcasted_iota(jnp.int32, (HW, HW), 0)
    sel = (p == src_ref[0]).astype(jnp.float32)                      # (HW, HW)

    y = jnp.dot(x_ref[0], sel, preferred_element_type=jnp.float32)   # (C, HW)

    # brightness + clamp (pointwise, commutes with the pixel selection above)
    o_ref[0] = jnp.clip(y + bright, 0.0, 1.0).astype(o_ref.dtype)


def data_augment(x, offsets, brightness):
    """x: (B, C, H, W) float32 in [0, 1].
    offsets: (B, 2) int32, crop top-left in [0, 2*PAD].
    brightness: (1,) float32 additive brightness delta."""
    B, C, H, W = x.shape
    HW = H * W

    # Flattened gather index with the ReplicationPad2d clamp baked in:
    #   out[b, c, i, j] = x[b, c, clip(i + oy_b - PAD, 0, H-1),
    #                             clip(j + ox_b - PAD, 0, W-1)]
    # Built once here (B*HW int32, ~2 KiB), so the kernel does no int div/mod.
    i = jnp.arange(H, dtype=jnp.int32)[None, :, None]                 # (1, H, 1)
    j = jnp.arange(W, dtype=jnp.int32)[None, None, :]                 # (1, 1, W)
    ri = jnp.clip(i + offsets[:, 0][:, None, None] - PAD, 0, H - 1)   # (B, H, 1)
    cj = jnp.clip(j + offsets[:, 1][:, None, None] - PAD, 0, W - 1)   # (B, 1, W)
    src = (ri * W + cj).reshape(B, 1, HW).astype(jnp.int32)           # (B, 1, HW)

    x_flat = x.reshape(B, C, HW)   # contiguous reshape: free bitcast, lane-dense blocks

    kernel = functools.partial(_augment_kernel, HW=HW)

    out_flat = pl.pallas_call(
        kernel,
        out_shape=jax.ShapeDtypeStruct((B, C, HW), x.dtype),
        grid_spec=pltpu.PrefetchScalarGridSpec(
            num_scalar_prefetch=0,
            grid=(B,),
            in_specs=[
                pl.BlockSpec(memory_space=pltpu.MemorySpace.SMEM),   # brightness (1,)
                pl.BlockSpec((1, C, HW), lambda b: (b, 0, 0)),       # x, flattened
                pl.BlockSpec((1, 1, HW), lambda b: (b, 0, 0)),       # gather indices
            ],
            out_specs=pl.BlockSpec((1, C, HW), lambda b: (b, 0, 0)),
        ),
        compiler_params=pltpu.CompilerParams(
            dimension_semantics=("parallel",)
        ),
    )(brightness, x_flat, src)

    return out_flat.reshape(B, C, H, W)


def _reference(x, offsets, brightness):
    B, C, H, W = x.shape
    xp = jnp.pad(x, ((0, 0), (0, 0), (PAD, PAD), (PAD, PAD)), mode="edge")
    outs = []
    for b in range(B):
        oy = int(offsets[b, 0])
        ox = int(offsets[b, 1])
        crop = xp[b, :, oy:oy + H, ox:ox + W]
        outs.append(jnp.clip(crop + brightness[0], 0.0, 1.0))
    return jnp.stack(outs, axis=0)


if __name__ == "__main__":
    key = jax.random.PRNGKey(0)
    k_x, k_off, k_b = jax.random.split(key, 3)

    B, C, H, W = 2, 4, 16, 16            # config['height']=16, config['width']=16
    x = jax.random.uniform(k_x, (B, C, H, W), dtype=jnp.float32)
    # RandomCrop of the padded image -> per-sample top-left in [0, 2*PAD]
    offsets = jax.random.randint(k_off, (B, 2), 0, 2 * PAD + 1, dtype=jnp.int32)
    # brightness_change ~ U(-clip, clip), single scalar (numpy rng in the module)
    brightness = jax.random.uniform(
        k_b, (1,), minval=-CLIP, maxval=CLIP, dtype=jnp.float32
    )

    out = jax.jit(data_augment)(x, offsets, brightness)
    out = jax.block_until_ready(out)

    ref = _reference(x, offsets, brightness)
    assert out.shape == (B, C, H, W)
    assert np.allclose(np.asarray(out), np.asarray(ref), atol=1e-5, rtol=1e-5)

    print("KERNEL_OK")
</pallas_src>

<mosaic_0001>
module attributes {stable_mosaic.version = 11 : i64} {
  func.func @_augment_kernel(%arg0: i32, %arg1: memref<1xf32, #tpu.memory_space<smem>>, %arg2: memref<1x4x256xf32, #tpu.memory_space<vmem>>, %arg3: memref<1x1x256xi32, #tpu.memory_space<vmem>>, %arg4: memref<1x4x256xf32, #tpu.memory_space<vmem>>) attributes {dimension_semantics = [#tpu.dimension_semantics<parallel>], iteration_bounds = array<i64: 2>, scalar_prefetch = 0 : i64, scratch_operands = 0 : i64, tpu.core_type = #tpu.core_type<tc>, window_params = [{transform_indices = @transform_0, window_bounds = array<i64: 1>}, {transform_indices = @transform_1, window_bounds = array<i64: 1, 4, 256>}, {transform_indices = @transform_2, window_bounds = array<i64: 1, 1, 256>}, {transform_indices = @transform_3, window_bounds = array<i64: 1, 4, 256>}]} {
    %c0 = arith.constant 0 : index
    %0 = memref.load %arg1[%c0] : memref<1xf32, #tpu.memory_space<smem>>
    %1 = tpu.iota {dimensions = array<i32: 0>} : vector<256x256xi32>
    %c0_0 = arith.constant 0 : index
    %c0_1 = arith.constant 0 : index
    %c0_2 = arith.constant 0 : index
    %2 = vector.load %arg3[%c0_0, %c0_1, %c0_2] : memref<1x1x256xi32, #tpu.memory_space<vmem>>, vector<1x1x256xi32>
    %3 = vector.shape_cast %2 : vector<1x1x256xi32> to vector<1x256xi32>
    %4 = vector.broadcast %3 : vector<1x256xi32> to vector<256x256xi32>
    %5 = arith.cmpi eq, %1, %4 : vector<256x256xi32>
    %6 = arith.extui %5 : vector<256x256xi1> to vector<256x256xi32>
    %7 = arith.sitofp %6 : vector<256x256xi32> to vector<256x256xf32>
    %c0_3 = arith.constant 0 : index
    %c0_4 = arith.constant 0 : index
    %c0_5 = arith.constant 0 : index
    %8 = vector.load %arg2[%c0_3, %c0_4, %c0_5] : memref<1x4x256xf32, #tpu.memory_space<vmem>>, vector<1x4x256xf32>
    %9 = vector.shape_cast %8 : vector<1x4x256xf32> to vector<4x256xf32>
    %cst = arith.constant dense<0.000000e+00> : vector<4x256xf32>
    %10 = tpu.matmul %9, %7, %cst {dimension_numbers = #tpu.dot_dimension_numbers<[1], [0], [0], [1], [0, 0, 1, 1], [], []>} : vector<4x256xf32>, vector<256x256xf32>, vector<4x256xf32> -> vector<4x256xf32>
    %11 = vector.broadcast %0 : f32 to vector<4x256xf32>
    %12 = arith.addf %10, %11 : vector<4x256xf32>
    %cst_6 = arith.constant 0.000000e+00 : f32
    %cst_7 = arith.constant 1.000000e+00 : f32
    %13 = vector.broadcast %cst_6 : f32 to vector<4x256xf32>
    %14 = arith.maximumf %13, %12 : vector<4x256xf32>
    %15 = vector.broadcast %cst_7 : f32 to vector<4x256xf32>
    %16 = arith.minimumf %15, %14 : vector<4x256xf32>
    %c0_8 = arith.constant 0 : index
    %c0_9 = arith.constant 0 : index
    %c0_10 = arith.constant 0 : index
    %17 = vector.load %arg4[%c0_8, %c0_9, %c0_10] : memref<1x4x256xf32, #tpu.memory_space<vmem>>, vector<1x4x256xf32>
    %18 = vector.shape_cast %17 : vector<1x4x256xf32> to vector<4x256xf32>
    %19 = vector.shape_cast %16 : vector<4x256xf32> to vector<1x4x256xf32>
    tpu.vector_store %arg4[%c0_8, %c0_9, %c0_10], %19 {strides = array<i32>} : memref<1x4x256xf32, #tpu.memory_space<vmem>>, vector<1x4x256xf32>,
    return
  }
  func.func @transform_0(%arg0: i32) -> i32 {
    %c0_i32 = arith.constant 0 : i32
    %c0_i32_0 = arith.constant 0 : i32
    return %c0_i32 : i32
  }
  func.func @transform_1(%arg0: i32) -> (i32, i32, i32) {
    %c0_i32 = arith.constant 0 : i32
    %c0_i32_0 = arith.constant 0 : i32
    %c0_i32_1 = arith.constant 0 : i32
    return %arg0, %c0_i32, %c0_i32_0 : i32, i32, i32
  }
  func.func @transform_2(%arg0: i32) -> (i32, i32, i32) {
    %c0_i32 = arith.constant 0 : i32
    %c0_i32_0 = arith.constant 0 : i32
    %c0_i32_1 = arith.constant 0 : i32
    return %arg0, %c0_i32, %c0_i32_0 : i32, i32, i32
  }
  func.func @transform_3(%arg0: i32) -> (i32, i32, i32) {
    %c0_i32 = arith.constant 0 : i32
    %c0_i32_0 = arith.constant 0 : i32
    %c0_i32_1 = arith.constant 0 : i32
    return %arg0, %c0_i32, %c0_i32_0 : i32, i32, i32
  }
}

</mosaic_0001>

<llo_original>
// kernel: data_augment.1
$region0: #{data_augment.1}
  #allocation0 [shape = 'u32[]', space=smem, size = 0x4, offset = 0x4, fixed_abs, tag = 'smem constant byte address 0x4 - core index']
  #allocation1 [shape = 'u32[144,128]{1,0:T(1,128)}', space=vmem, size = 0x12000, scoped, tag = 'internal scratch']
  #allocation2 [shape = 'f32[1]{0:T(128)S(6)}', space=smem, size = 0x200, scoped, tag = 'scoped memory for data_augment.1']
  %s0 = inlined_call_operand.<no memory space> [shape: f32[1], index: 0, kind: input, shape index: {}]
  %s1 = inlined_call_operand.vmem [shape: f32[2,4,256], index: 1, kind: input, shape index: {}]
  %s2 = inlined_call_operand.vmem [shape: s32[2,1,256], index: 2, kind: input, shape index: {}]
  %s3 = inlined_call_operand.vmem [shape: f32[2,4,256], index: 3, kind: output, shape index: {}]
  %s4 = sld [smem:[#allocation0]]
  $region45: #{data_augment.1} parent=0
    _
  %s6 = ssub.s32 1, %s4
  %s7 = scalar_select 0, %s6, %s4
  %8 = sst [smem:[#allocation2]] %s0
  loop: start=0, step=1, limit=4
  $region2: #{data_augment.1} parent=0 // loop_pre_header
    _
  $region3: #{data_augment.1} parent=0 // loop_header
    %s10 = sphi 0, %s14
    %p11 = scmp.ge.s32.totalorder %s10, 4
    %s18 = sphi 0, %s18
    %s20 = sphi 0, %s18
    %s21 = sphi 0, %s20
    %s35 = sphi 0, %s21
    %s41 = sphi 0, %s43
    %s44 = sphi 0, %s41
    %s45 = sphi 0, %s44
    %s61 = sphi 0, %s45
    %s67 = sphi 0, %s69
    %s70 = sphi 0, %s67
    %s71 = sphi 0, %s70
    %s87 = sphi 0, %s71
    %s93 = sphi 0, %s95
    %s96 = sphi 0, %s93
    %s97 = sphi 0, %s96
    %s113 = sphi 0, %s97
  $region4: #{data_augment.1} parent=0 // loop_header_branch
    %13 = sbr.rel (%p11) target = $region8
  $region5: #{data_augment.1} parent=0 // loop_body
    %s15 = ssub.s32 %s10, 1
    %s16 = ssub.s32 %s10, 2
    %s17 = sadd.s32 %s10, 1
    %s19 = sadd.s32 %s18, 1
    %p22 = scmp.eq.s32.totalorder %s10, 1
    %p23 = scmp.ne.s32.totalorder %s18, %s20
    %p24 = scmp.eq.s32.totalorder %s10, 0
    %p25 = por %p23, %p24
    %p26 = scmp.ne.s32.totalorder %s18, %s20
    %p27 = scmp.eq.s32.totalorder %s15, 1
    %p28 = por %p26, %p27
    %p29 = scmp.ne.s32.totalorder %s20, %s21
    %p30 = scmp.eq.s32.totalorder %s15, 0
    %p31 = por %p29, %p30
    %p32 = scmp.ne.s32.totalorder %s20, %s21
    %p33 = scmp.eq.s32.totalorder %s16, 1
    %p34 = por %p32, %p33
    %p36 = scmp.ne.s32.totalorder %s21, %s35
    %p37 = scmp.eq.s32.totalorder %s16, 0
    %p38 = por %p36, %p37
    %s39 = ssub.s32 %s10, %s17
    %p40 = scmp.eq.s32.totalorder %s39, 0
    %s42 = sadd.s32 %s41, 1
    %s43 = scalar_select %p40, %s41, %s42
    %p46 = pneg %p40
    %p47 = scmp.eq.s32.totalorder %s10, 1
    %p48 = por %p46, %p47
    %p49 = scmp.ne.s32.totalorder %s41, %s44
    %p50 = scmp.eq.s32.totalorder %s10, 0
    %p51 = por %p49, %p50
    %p52 = scmp.ne.s32.totalorder %s41, %s44
    %p53 = scmp.eq.s32.totalorder %s15, 1
    %p54 = por %p52, %p53
    %p55 = scmp.ne.s32.totalorder %s44, %s45
    %p56 = scmp.eq.s32.totalorder %s15, 0
    %p57 = por %p55, %p56
    %p58 = scmp.ne.s32.totalorder %s44, %s45
    %p59 = scmp.eq.s32.totalorder %s16, 1
    %p60 = por %p58, %p59
    %p62 = scmp.ne.s32.totalorder %s45, %s61
    %p63 = scmp.eq.s32.totalorder %s16, 0
    %p64 = por %p62, %p63
    %s65 = ssub.s32 %s10, %s17
    %p66 = scmp.eq.s32.totalorder %s65, 0
    %s68 = sadd.s32 %s67, 1
    %s69 = scalar_select %p66, %s67, %s68
    %p72 = pneg %p66
    %p73 = scmp.eq.s32.totalorder %s10, 1
    %p74 = por %p72, %p73
    %p75 = scmp.ne.s32.totalorder %s67, %s70
    %p76 = scmp.eq.s32.totalorder %s10, 0
    %p77 = por %p75, %p76
    %p78 = scmp.ne.s32.totalorder %s67, %s70
    %p79 = scmp.eq.s32.totalorder %s15, 1
    %p80 = por %p78, %p79
    %p81 = scmp.ne.s32.totalorder %s70, %s71
    %p82 = scmp.eq.s32.totalorder %s15, 0
    %p83 = por %p81, %p82
    %p84 = scmp.ne.s32.totalorder %s70, %s71
    %p85 = scmp.eq.s32.totalorder %s16, 1
    %p86 = por %p84, %p85
    %p88 = scmp.ne.s32.totalorder %s71, %s87
    %p89 = scmp.eq.s32.totalorder %s16, 0
    %p90 = por %p88, %p89
    %s91 = ssub.s32 %s10, %s17
    %p92 = scmp.eq.s32.totalorder %s91, 0
    %s94 = sadd.s32 %s93, 1
    %s95 = scalar_select %p92, %s93, %s94
    %p98 = pneg %p92
    %p99 = scmp.eq.s32.totalorder %s10, 1
    %p100 = por %p98, %p99
    %p101 = scmp.ne.s32.totalorder %s93, %s96
    %p102 = scmp.eq.s32.totalorder %s10, 0
    %p103 = por %p101, %p102
    %p104 = scmp.ne.s32.totalorder %s93, %s96
    %p105 = scmp.eq.s32.totalorder %s15, 1
    %p106 = por %p104, %p105
    %p107 = scmp.ne.s32.totalorder %s96, %s97
    %p108 = scmp.eq.s32.totalorder %s15, 0
    %p109 = por %p107, %p108
    %p110 = scmp.ne.s32.totalorder %s96, %s97
    %p111 = scmp.eq.s32.totalorder %s16, 1
    %p112 = por %p110, %p111
    %p114 = scmp.ne.s32.totalorder %s97, %s113
    %p115 = scmp.eq.s32.totalorder %s16, 0
    %p116 = por %p114, %p115
    %p117 = scmp.le.s32.totalorder 1, %s10
    %p118 = scmp.lt.s32.totalorder %s10, 3
    %p119 = pnand %p117, %p118
    %p120 = pneg %p119
    // Predicated region
    $region9: #{data_augment.1} parent=5 // pred_check
      _
    $region10: #{data_augment.1} parent=5 // pred_check_branch
      %122 = sbr.rel (%p119) target = $region12
    $region11: #{data_augment.1} parent=5 // pred_region
      %s123 = ssub.s32 %s10, 1
      // Predicated region
      $region13: #{data_augment.1} parent=11 // pred_check
        %p124 = pneg %p31
      $region14: #{data_augment.1} parent=11 // pred_check_branch
        %126 = sbr.rel (%p124) target = $region16
      $region15: #{data_augment.1} parent=11 // pred_region
        _
      $region16: #{data_augment.1} parent=11 // pred_fallthru
        _
    $region12: #{data_augment.1} parent=5 // pred_fallthru
      _
    %p127 = scmp.lt.s32.totalorder %s10, 2
    // Predicated region
    $region17: #{data_augment.1} parent=5 // pred_check
      %p128 = pneg %p127
    $region18: #{data_augment.1} parent=5 // pred_check_branch
      %130 = sbr.rel (%p128) target = $region20
    $region19: #{data_augment.1} parent=5 // pred_region
      // Predicated region
      $region21: #{data_augment.1} parent=19 // pred_check
        %p131 = pneg %p51
      $region22: #{data_augment.1} parent=19 // pred_check_branch
        %133 = sbr.rel (%p131) target = $region24
      $region23: #{data_augment.1} parent=19 // pred_region
        %p134 = scmp.lt.s32.totalorder %s10, 1
        %s135 = scalar_select %p134, %s10, 1
        %s136 = smul.addr %s135, 2
        %s137 = smul.addr %s136, 4
        %s138 = scalar_lea.vmem %s1, %s137
      $region24: #{data_augment.1} parent=19 // pred_fallthru
        _
      // Predicated region
      $region25: #{data_augment.1} parent=19 // pred_check
        %p139 = pneg %p77
      $region26: #{data_augment.1} parent=19 // pred_check_branch
        %141 = sbr.rel (%p139) target = $region28
      $region27: #{data_augment.1} parent=19 // pred_region
        %p142 = scmp.lt.s32.totalorder %s10, 1
        %s143 = scalar_select %p142, %s10, 1
        %s144 = smul.addr %s143, 2
        %s145 = scalar_lea.vmem %s2, %s144
      $region28: #{data_augment.1} parent=19 // pred_fallthru
        _
    $region20: #{data_augment.1} parent=5 // pred_fallthru
      _
    %p146 = scmp.le.s32.totalorder 1, %s10
    %p147 = scmp.lt.s32.totalorder %s10, 3
    %p148 = pnand %p146, %p147
    %p149 = pneg %p148
    // Predicated region
    $region29: #{data_augment.1} parent=5 // pred_check
      _
    $region30: #{data_augment.1} parent=5 // pred_check_branch
      %151 = sbr.rel (%p148) target = $region32
    $region31: #{data_augment.1} parent=5 // pred_region
      %s152 = ssub.s32 %s10, 1
      %p153 = pneg %p31
      %p154 = pneg %p28
      %p155 = scmp.lt.s32.totalorder %s15, 1
      %s156 = scalar_select %p155, %s15, 1
      %s157 = smul.addr %s156, 2
      %s158 = smul.addr %s157, 4
      %s159 = scalar_lea.vmem %s1, %s158
      %p160 = pneg %p57
      %p161 = pneg %p54
      %p162 = scmp.lt.s32.totalorder %s15, 1
      %s163 = scalar_select %p162, %s15, 1
      %s164 = smul.addr %s163, 2
      %s165 = scalar_lea.vmem %s2, %s164
      %p166 = pneg %p83
      %p167 = pneg %p80
      %p168 = pneg %p109
      %p169 = pneg %p106
      %p170 = scmp.lt.s32.totalorder %s15, 1
      %s171 = scalar_select %p170, %s15, 1
      %s172 = smul.addr %s171, 2
      %s173 = smul.addr %s172, 4
      %s174 = scalar_lea.vmem %s3, %s173
      %p175 = scmp.lt.s32.totalorder %s15, 1
      %s176 = scalar_select %p175, %s15, 1
      %s177 = smul.addr %s176, 2
      %s178 = smul.addr %s177, 4
      %s179 = scalar_lea.vmem %s1, %s178
      %p180 = scmp.lt.s32.totalorder %s15, 1
      %s181 = scalar_select %p180, %s15, 1
      %s182 = smul.addr %s181, 2
      %s183 = scalar_lea.vmem %s2, %s182
      %p184 = scmp.lt.s32.totalorder %s15, 1
      %s185 = scalar_select %p184, %s15, 1
      %s186 = smul.addr %s185, 2
      %s187 = smul.addr %s186, 4
      %s188 = scalar_lea.vmem %s3, %s187
      %s189 = sld [smem:[#allocation2]]
      %v190 = vlaneseq
      %v191 = vshrl.u32 %v190, 7
      %v192 = vadd.s32 %v191, 8
      %v193 = vadd.s32 %v191, 16
      %v194 = vadd.s32 %v191, 24
      %v195 = vadd.s32 %v191, 32
      %v196 = vadd.s32 %v191, 40
      %v197 = vadd.s32 %v191, 48
      %v198 = vadd.s32 %v191, 56
      %v199 = vadd.s32 %v191, 64
      %v200 = vadd.s32 %v191, 72
      %v201 = vadd.s32 %v191, 80
      %v202 = vadd.s32 %v191, 88
      %v203 = vadd.s32 %v191, 96
      %v204 = vadd.s32 %v191, 104
      %v205 = vadd.s32 %v191, 112
      %v206 = vadd.s32 %v191, 120
      %v207 = vadd.s32 %v191, 128
      %v208 = vadd.s32 %v191, 136
      %v209 = vadd.s32 %v191, 144
      %v210 = vadd.s32 %v191, 152
      %v211 = vadd.s32 %v191, 160
      %v212 = vadd.s32 %v191, 168
      %v213 = vadd.s32 %v191, 176
      %v214 = vadd.s32 %v191, 184
      %v215 = vadd.s32 %v191, 192
      %v216 = vadd.s32 %v191, 200
      %v217 = vadd.s32 %v191, 208
      %v218 = vadd.s32 %v191, 216
      %v219 = vadd.s32 %v191, 224
      %v220 = vadd.s32 %v191, 232
      %v221 = vadd.s32 %v191, 240
      %v222 = vadd.s32 %v191, 248
      %v223 = vld [vmem:[%s183] sm:$0x3]
      %v224 = vlaneseq
      %v225 = vshrl.u32 %v224, 7
      %v226 = vsub.s32 0, %v225
      %v227 = vrot.slane %v223, %v226
      %v228 = vlaneseq
      %v229 = vshrl.u32 %v228, 7
      %v230 = vsub.s32 1, %v229
      %v231 = vrot.slane %v223, %v230
      %vm232 = vcmp.eq.s32.totalorder %v191, %v227
      %vm233 = vcmp.eq.s32.totalorder %v191, %v231
      %vm234 = vcmp.eq.s32.totalorder %v192, %v227
      %vm235 = vcmp.eq.s32.totalorder %v192, %v231
      %vm236 = vcmp.eq.s32.totalorder %v193, %v227
      %vm237 = vcmp.eq.s32.totalorder %v193, %v231
      %vm238 = vcmp.eq.s32.totalorder %v194, %v227
      %vm239 = vcmp.eq.s32.totalorder %v194, %v231
      %vm240 = vcmp.eq.s32.totalorder %v195, %v227
      %vm241 = vcmp.eq.s32.totalorder %v195, %v231
      %vm242 = vcmp.eq.s32.totalorder %v196, %v227
      %vm243 = vcmp.eq.s32.totalorder %v196, %v231
      %vm244 = vcmp.eq.s32.totalorder %v197, %v227
      %vm245 = vcmp.eq.s32.totalorder %v197, %v231
      %vm246 = vcmp.eq.s32.totalorder %v198, %v227
      %vm247 = vcmp.eq.s32.totalorder %v198, %v231
      %vm248 = vcmp.eq.s32.totalorder %v199, %v227
      %vm249 = vcmp.eq.s32.totalorder %v199, %v231
      %vm250 = vcmp.eq.s32.totalorder %v200, %v227
      %vm251 = vcmp.eq.s32.totalorder %v200, %v231
      %vm252 = vcmp.eq.s32.totalorder %v201, %v227
      %vm253 = vcmp.eq.s32.totalorder %v201, %v231
      %vm254 = vcmp.eq.s32.totalorder %v202, %v227
      %vm255 = vcmp.eq.s32.totalorder %v202, %v231
      %vm256 = vcmp.eq.s32.totalorder %v203, %v227
      %vm257 = vcmp.eq.s32.totalorder %v203, %v231
      %vm258 = vcmp.eq.s32.totalorder %v204, %v227
      %vm259 = vcmp.eq.s32.totalorder %v204, %v231
      %vm260 = vcmp.eq.s32.totalorder %v205, %v227
      %vm261 = vcmp.eq.s32.totalorder %v205, %v231
      %vm262 = vcmp.eq.s32.totalorder %v206, %v227
      %vm263 = vcmp.eq.s32.totalorder %v206, %v231
      %vm264 = vcmp.eq.s32.totalorder %v207, %v227
      %vm265 = vcmp.eq.s32.totalorder %v207, %v231
      %vm266 = vcmp.eq.s32.totalorder %v208, %v227
      %vm267 = vcmp.eq.s32.totalorder %v208, %v231
      %vm268 = vcmp.eq.s32.totalorder %v209, %v227
      %vm269 = vcmp.eq.s32.totalorder %v209, %v231
      %vm270 = vcmp.eq.s32.totalorder %v210, %v227
      %vm271 = vcmp.eq.s32.totalorder %v210, %v231
      %vm272 = vcmp.eq.s32.totalorder %v211, %v227
      %vm273 = vcmp.eq.s32.totalorder %v211, %v231
      %vm274 = vcmp.eq.s32.totalorder %v212, %v227
      %vm275 = vcmp.eq.s32.totalorder %v212, %v231
      %vm276 = vcmp.eq.s32.totalorder %v213, %v227
      %vm277 = vcmp.eq.s32.totalorder %v213, %v231
      %vm278 = vcmp.eq.s32.totalorder %v214, %v227
      %vm279 = vcmp.eq.s32.totalorder %v214, %v231
      %vm280 = vcmp.eq.s32.totalorder %v215, %v227
      %vm281 = vcmp.eq.s32.totalorder %v215, %v231
      %vm282 = vcmp.eq.s32.totalorder %v216, %v227
      %vm283 = vcmp.eq.s32.totalorder %v216, %v231
      %vm284 = vcmp.eq.s32.totalorder %v217, %v227
      %vm285 = vcmp.eq.s32.totalorder %v217, %v231
      %vm286 = vcmp.eq.s32.totalorder %v218, %v227
      %vm287 = vcmp.eq.s32.totalorder %v218, %v231
      %vm288 = vcmp.eq.s32.totalorder %v219, %v227
      %vm289 = vcmp.eq.s32.totalorder %v219, %v231
      %vm290 = vcmp.eq.s32.totalorder %v220, %v227
      %vm291 = vcmp.eq.s32.totalorder %v220, %v231
      %vm292 = vcmp.eq.s32.totalorder %v221, %v227
      %vm293 = vcmp.eq.s32.totalorder %v221, %v231
      %vm294 = vcmp.eq.s32.totalorder %v222, %v227
      %vm295 = vcmp.eq.s32.totalorder %v222, %v231
      %v296 = vsel %vm232, 1, 0
      %v297 = vsel %vm233, 1, 0
      %v298 = vsel %vm234, 1, 0
      %v299 = vsel %vm235, 1, 0
      %v300 = vsel %vm236, 1, 0
      %v301 = vsel %vm237, 1, 0
      %v302 = vsel %vm238, 1, 0
      %v303 = vsel %vm239, 1, 0
      %v304 = vsel %vm240, 1, 0
      %v305 = vsel %vm241, 1, 0
      %v306 = vsel %vm242, 1, 0
      %v307 = vsel %vm243, 1, 0
      %v308 = vsel %vm244, 1, 0
      %v309 = vsel %vm245, 1, 0
      %v310 = vsel %vm246, 1, 0
      %v311 = vsel %vm247, 1, 0
      %v312 = vsel %vm248, 1, 0
      %v313 = vsel %vm249, 1, 0
      %v314 = vsel %vm250, 1, 0
      %v315 = vsel %vm251, 1, 0
      %v316 = vsel %vm252, 1, 0
      %v317 = vsel %vm253, 1, 0
      %v318 = vsel %vm254, 1, 0
      %v319 = vsel %vm255, 1, 0
      %v320 = vsel %vm256, 1, 0
      %v321 = vsel %vm257, 1, 0
      %v322 = vsel %vm258, 1, 0
      %v323 = vsel %vm259, 1, 0
      %v324 = vsel %vm260, 1, 0
      %v325 = vsel %vm261, 1, 0
      %v326 = vsel %vm262, 1, 0
      %v327 = vsel %vm263, 1, 0
      %v328 = vsel %vm264, 1, 0
      %v329 = vsel %vm265, 1, 0
      %v330 = vsel %vm266, 1, 0
      %v331 = vsel %vm267, 1, 0
      %v332 = vsel %vm268, 1, 0
      %v333 = vsel %vm269, 1, 0
      %v334 = vsel %vm270, 1, 0
      %v335 = vsel %vm271, 1, 0
      %v336 = vsel %vm272, 1, 0
      %v337 = vsel %vm273, 1, 0
      %v338 = vsel %vm274, 1, 0
      %v339 = vsel %vm275, 1, 0
      %v340 = vsel %vm276, 1, 0
      %v341 = vsel %vm277, 1, 0
      %v342 = vsel %vm278, 1, 0
      %v343 = vsel %vm279, 1, 0
      %v344 = vsel %vm280, 1, 0
      %v345 = vsel %vm281, 1, 0
      %v346 = vsel %vm282, 1, 0
      %v347 = vsel %vm283, 1, 0
      %v348 = vsel %vm284, 1, 0
      %v349 = vsel %vm285, 1, 0
      %v350 = vsel %vm286, 1, 0
      %v351 = vsel %vm287, 1, 0
      %v352 = vsel %vm288, 1, 0
      %v353 = vsel %vm289, 1, 0
      %v354 = vsel %vm290, 1, 0
      %v355 = vsel %vm291, 1, 0
      %v356 = vsel %vm292, 1, 0
      %v357 = vsel %vm293, 1, 0
      %v358 = vsel %vm294, 1, 0
      %v359 = vsel %vm295, 1, 0
      %v360 = vcvt.s32.f32 %v296
      %v361 = vcvt.s32.f32 %v297
      %v362 = vcvt.s32.f32 %v298
      %v363 = vcvt.s32.f32 %v299
      %v364 = vcvt.s32.f32 %v300
      %v365 = vcvt.s32.f32 %v301
      %v366 = vcvt.s32.f32 %v302
      %v367 = vcvt.s32.f32 %v303
      %v368 = vcvt.s32.f32 %v304
      %v369 = vcvt.s32.f32 %v305
      %v370 = vcvt.s32.f32 %v306
      %v371 = vcvt.s32.f32 %v307
      %v372 = vcvt.s32.f32 %v308
      %v373 = vcvt.s32.f32 %v309
      %v374 = vcvt.s32.f32 %v310
      %v375 = vcvt.s32.f32 %v311
      %v376 = vcvt.s32.f32 %v312
      %v377 = vcvt.s32.f32 %v313
      %v378 = vcvt.s32.f32 %v314
      %v379 = vcvt.s32.f32 %v315
      %v380 = vcvt.s32.f32 %v316
      %v381 = vcvt.s32.f32 %v317
      %v382 = vcvt.s32.f32 %v318
      %v383 = vcvt.s32.f32 %v319
      %v384 = vcvt.s32.f32 %v320
      %v385 = vcvt.s32.f32 %v321
      %v386 = vcvt.s32.f32 %v322
      %v387 = vcvt.s32.f32 %v323
      %v388 = vcvt.s32.f32 %v324
      %v389 = vcvt.s32.f32 %v325
      %v390 = vcvt.s32.f32 %v326
      %v391 = vcvt.s32.f32 %v327
      %v392 = vcvt.s32.f32 %v328
      %v393 = vcvt.s32.f32 %v329
      %v394 = vcvt.s32.f32 %v330
      %v395 = vcvt.s32.f32 %v331
      %v396 = vcvt.s32.f32 %v332
      %v397 = vcvt.s32.f32 %v333
      %v398 = vcvt.s32.f32 %v334
      %v399 = vcvt.s32.f32 %v335
      %v400 = vcvt.s32.f32 %v336
      %v401 = vcvt.s32.f32 %v337
      %v402 = vcvt.s32.f32 %v338
      %v403 = vcvt.s32.f32 %v339
      %v404 = vcvt.s32.f32 %v340
      %v405 = vcvt.s32.f32 %v341
      %v406 = vcvt.s32.f32 %v342
      %v407 = vcvt.s32.f32 %v343
      %v408 = vcvt.s32.f32 %v344
      %v409 = vcvt.s32.f32 %v345
      %v410 = vcvt.s32.f32 %v346
      %v411 = vcvt.s32.f32 %v347
      %v412 = vcvt.s32.f32 %v348
      %v413 = vcvt.s32.f32 %v349
      %v414 = vcvt.s32.f32 %v350
      %v415 = vcvt.s32.f32 %v351
      %v416 = vcvt.s32.f32 %v352
      %v417 = vcvt.s32.f32 %v353
      %v418 = vcvt.s32.f32 %v354
      %v419 = vcvt.s32.f32 %v355
      %v420 = vcvt.s32.f32 %v356
      %v421 = vcvt.s32.f32 %v357
      %v422 = vcvt.s32.f32 %v358
      %v423 = vcvt.s32.f32 %v359
      %v424 = vld [vmem:[%s179] sm:$0xff]
      %v425 = vstv %s189
      %v427 = vcombine.high %v424, %v424
      %429 = vmatprep.subr.mxu0 %v391
      %430 = vmatpush1.msra.mxu0 %v390
      %431 = vmatprep.subr.mxu0 %v389
      %432 = vmatpush1.msra.mxu0 %v388
      %433 = vmatprep.subr.mxu0 %v387
      %434 = vmatpush1.msra.mxu0 %v386
      %435 = vmatprep.subr.mxu0 %v385
      %436 = vmatpush1.msra.mxu0 %v384
      %437 = vmatprep.subr.mxu0 %v383
      %438 = vmatpush1.msra.mxu0 %v382
      %439 = vmatprep.subr.mxu0 %v381
      %440 = vmatpush1.msra.mxu0 %v380
      %441 = vmatprep.subr.mxu0 %v379
      %442 = vmatpush1.msra.mxu0 %v378
      %443 = vmatprep.subr.mxu0 %v377
      %444 = vmatpush1.msra.mxu0 %v376
      %445 = vmatprep.subr.mxu0 %v375
      %446 = vmatpush1.msra.mxu0 %v374
      %447 = vmatprep.subr.mxu0 %v373
      %448 = vmatpush1.msra.mxu0 %v372
      %449 = vmatprep.subr.mxu0 %v371
      %450 = vmatpush1.msra.mxu0 %v370
      %451 = vmatprep.subr.mxu0 %v369
      %452 = vmatpush1.msra.mxu0 %v368
      %453 = vmatprep.subr.mxu0 %v367
      %454 = vmatpush1.msra.mxu0 %v366
      %455 = vmatprep.subr.mxu0 %v365
      %456 = vmatpush1.msra.mxu0 %v364
      %457 = vmatprep.subr.mxu0 %v363
      %458 = vmatpush1.msra.mxu0 %v362
      %459 = vmatprep.subr.mxu0 %v361
      %460 = vmatpush1.msra.mxu0 %v360
      %461 = vmatprep.subr.mxu0 %v423
      %462 = vmatpush2.msra.mxu0 %v422
      %463 = vmatprep.subr.mxu0 %v421
      %464 = vmatpush2.msra.mxu0 %v420
      %465 = vmatprep.subr.mxu0 %v419
      %466 = vmatpush2.msra.mxu0 %v418
      %467 = vmatprep.subr.mxu0 %v417
      %468 = vmatpush2.msra.mxu0 %v416
      %469 = vmatprep.subr.mxu0 %v415
      %470 = vmatpush2.msra.mxu0 %v414
      %471 = vmatprep.subr.mxu0 %v413
      %472 = vmatpush2.msra.mxu0 %v412
      %473 = vmatprep.subr.mxu0 %v411
      %474 = vmatpush2.msra.mxu0 %v410
      %475 = vmatprep.subr.mxu0 %v409
      %476 = vmatpush2.msra.mxu0 %v408
      %477 = vmatprep.subr.mxu0 %v407
      %478 = vmatpush2.msra.mxu0 %v406
      %479 = vmatprep.subr.mxu0 %v405
      %480 = vmatpush2.msra.mxu0 %v404
      %481 = vmatprep.subr.mxu0 %v403
      %482 = vmatpush2.msra.mxu0 %v402
      %483 = vmatprep.subr.mxu0 %v401
      %484 = vmatpush2.msra.mxu0 %v400
      %485 = vmatprep.subr.mxu0 %v399
      %486 = vmatpush2.msra.mxu0 %v398
      %487 = vmatprep.subr.mxu0 %v397
      %488 = vmatpush2.msra.mxu0 %v396
      %489 = vmatprep.subr.mxu0 %v395
      %490 = vmatpush2.msra.mxu0 %v394
      %491 = vmatprep.subr.mxu0 %v393
      %492 = vmatpush2.msra.mxu0 %v392
      %493 = vmatprep.mubr.f32.mxu0 %v427
      %494 = vmatmul.mubr.f32.gmra.mxu0 %v424
      %v495 = vpop.f32.mrf.mxu0
      %v496 = vadd.f32 %v425, %v495
      %v497 = vpop.f32.mrf.mxu0
      %v498 = vadd.f32 %v425, %v497
      %499 = vdwg.mxu0
      %v500 = vmax.f32 %v496, 0.0
      %v501 = vmax.f32 %v498, 0.0
      %v502 = vmin.f32 %v500, 1.0
      %v503 = vmin.f32 %v501, 1.0
      %v506 = vcombine.low %v502, %v503
      %508 = vst [vmem:[%s188] sm:$0xff] %v506
      %p509 = scmp.lt.s32.totalorder %s15, 1
      %s510 = scalar_select %p509, %s15, 1
      %s511 = smul.addr %s510, 2
      %s512 = smul.addr %s511, 4
      %s513 = scalar_lea.vmem %s3, %s512
      // Predicated region
      $region33: #{data_augment.1} parent=31 // pred_check
        %p514 = pneg %p106
      $region34: #{data_augment.1} parent=31 // pred_check_branch
        %516 = sbr.rel (%p514) target = $region36
      $region35: #{data_augment.1} parent=31 // pred_region
        _
      $region36: #{data_augment.1} parent=31 // pred_fallthru
        _
    $region32: #{data_augment.1} parent=5 // pred_fallthru
      _
    %p517 = scmp.le.s32.totalorder 2, %s10
    // Predicated region
    $region37: #{data_augment.1} parent=5 // pred_check
      %p518 = pneg %p517
    $region38: #{data_augment.1} parent=5 // pred_check_branch
      %520 = sbr.rel (%p518) target = $region40
    $region39: #{data_augment.1} parent=5 // pred_region
      %s521 = ssub.s32 %s10, 2
      // Predicated region
      $region41: #{data_augment.1} parent=39 // pred_check
        %p522 = pneg %p112
      $region42: #{data_augment.1} parent=39 // pred_check_branch
        %524 = sbr.rel (%p522) target = $region44
      $region43: #{data_augment.1} parent=39 // pred_region
        %p525 = scmp.lt.s32.totalorder %s16, 1
        %s526 = scalar_select %p525, %s16, 1
        %s527 = smul.addr %s526, 2
        %s528 = smul.addr %s527, 4
        %s529 = scalar_lea.vmem %s3, %s528
      $region44: #{data_augment.1} parent=39 // pred_fallthru
        _
    $region40: #{data_augment.1} parent=5 // pred_fallthru
      _
  $region6: #{data_augment.1} parent=0 // loop_footer
    %s14 = sadd.s32 1, %s10
  $region7: #{data_augment.1} parent=0 // loop_footer_branch
    %9 = sbr.rel target = $region3
  $region8: #{data_augment.1} parent=0 // loop_exit
    _

</llo_original>
